<compile_context>
chip_gen: v5e
topology: v5e:2x2
jax: 0.10.0
libtpu: 0.0.40
codegen_flags: <defaults>
</compile_context>

<pallas_src>
import functools
import math

import jax
import jax.numpy as jnp
from jax import lax
from jax.experimental import pallas as pl
from jax.experimental.pallas import tpu as pltpu

K = 5               # kernel_size
PAD = 2             # reflect padding
LN_EPS = 1e-5
LEAKY_SLOPE = 0.01  # nn.LeakyReLU default negative_slope


def _round_up(v, m):
    return (v + m - 1) // m * m


def _cdiv(a, b):
    return -(-a // b)


def _layernorm(h, gamma, beta):
    # Two-pass statistics (mean, then mean of squared deviation), all in f32.
    mu = jnp.mean(h, axis=-1, keepdims=True)
    d = h - mu
    var = jnp.mean(d * d, axis=-1, keepdims=True)
    return d * lax.rsqrt(var + LN_EPS) * gamma + beta


def _leaky_relu(h):
    return jnp.where(h >= 0, h, LEAKY_SLOPE * h)


def convblock_kernel(x_ref, w1_ref, b1_ref, g1_ref, be1_ref,
                     w2_ref, b2_ref, g2_ref, be2_ref, o_ref, pad_s):
    # x_ref : (nb, L, Cin)        un-padded input block (f32)
    # w1_ref: (K*Cin, Cout)       conv1 weight, im2col layout (tap-major rows)
    # w2_ref: (K*Cout, Cout)      conv2 weight, im2col layout
    # b*/g*/be*: (1, Cout)        conv bias / LN gamma / LN beta (f32)
    # o_ref : (nb, L, Cout)
    # pad_s : (nb, Lp, Cmax)      shared reflect-pad scratch, matmul dtype
    nb, L, cin = x_ref.shape
    cout = o_ref.shape[2]
    mm_dtype = pad_s.dtype           # bf16 (production) or f32; accumulation f32

    # ---- ReflectionPad1d(2) of the input, written straight into scratch ----
    pad_s[:, PAD:PAD + L, :cin] = x_ref[...].astype(mm_dtype)
    pad_s[:, 0:1, :cin] = x_ref[:, 2:3, :].astype(mm_dtype)
    pad_s[:, 1:2, :cin] = x_ref[:, 1:2, :].astype(mm_dtype)
    pad_s[:, L + 2:L + 3, :cin] = x_ref[:, L - 2:L - 1, :].astype(mm_dtype)
    pad_s[:, L + 3:L + 4, :cin] = x_ref[:, L - 3:L - 2, :].astype(mm_dtype)

    # ---- conv1: one im2col matmul over all nb*L positions ----
    cols = jnp.concatenate([pad_s[:, k:k + L, :cin] for k in range(K)], axis=-1)
    cols = cols.reshape(nb * L, K * cin)               # already mm_dtype
    h = jnp.dot(cols, w1_ref[...], preferred_element_type=jnp.float32)
    h = h + b1_ref[...]
    h = _leaky_relu(_layernorm(h, g1_ref[...], be1_ref[...]))   # f32 (nb*L, Cout)

    # ---- ReflectionPad1d(2) of the intermediate, REUSING the same scratch ----
    # (the conv1 padded view is dead once `cols` was consumed by the matmul)
    h3 = h.reshape(nb, L, cout).astype(mm_dtype)
    pad_s[:, PAD:PAD + L, :cout] = h3
    pad_s[:, 0:1, :cout] = h3[:, 2:3, :]
    pad_s[:, 1:2, :cout] = h3[:, 1:2, :]
    pad_s[:, L + 2:L + 3, :cout] = h3[:, L - 2:L - 1, :]
    pad_s[:, L + 3:L + 4, :cout] = h3[:, L - 3:L - 2, :]

    # ---- conv2: one im2col matmul ----
    cols2 = jnp.concatenate([pad_s[:, k:k + L, :cout] for k in range(K)], axis=-1)
    cols2 = cols2.reshape(nb * L, K * cout)
    h2 = jnp.dot(cols2, w2_ref[...], preferred_element_type=jnp.float32)
    h2 = h2 + b2_ref[...]
    h2 = _leaky_relu(_layernorm(h2, g2_ref[...], be2_ref[...]))

    # TODO(synk): Dropout1d(0.1) is train-time only; inference-mode identity here.
    o_ref[...] = h2.reshape(nb, L, cout).astype(o_ref.dtype)


def _physical_vmem_bytes():
    """Per-TensorCore VMEM (v5e/v6e: 128 MiB, v7x: 64 MiB); safe fallback."""
    try:
        info = pltpu.get_tpu_info()
        v = int(getattr(info, "vmem_capacity_bytes", 0) or 0)
        if v > 0:
            return v
    except Exception:
        pass
    return 64 * 2**20   # conservative (v7x)


def _select_nb(N, L, Cin, Cout, mm_itemsize, vmem_budget, block_n):
    """Batch rows per grid step, derived from the per-chip VMEM budget."""
    Lp = _round_up(L + 2 * PAD, 8)
    Cmax = max(Cin, Cout)
    f32 = 4
    per_elem = (
        2 * L * Cin * f32                       # input block (double-buffered)
        + 2 * L * Cout * f32                    # output block (double-buffered)
        + Lp * Cmax * mm_itemsize               # shared reflect-pad scratch
        + L * K * (Cin + Cout) * mm_itemsize    # im2col temporaries (mm dtype)
        + 3 * L * Cout * f32                    # conv / LayerNorm f32 temporaries
    )
    const_bytes = (
        2 * (K * Cin * Cout + K * Cout * Cout) * mm_itemsize   # weights (2 bufs)
        + 6 * 2 * 8 * _round_up(Cout, 128) * f32               # bias / LN affine
    )
    usable = max(int(vmem_budget * 0.9) - const_bytes, per_elem)
    nb = max(1, usable // per_elem)
    # Keep >= 2 grid steps (v7x has two TensorCores sharded via "parallel")
    # and >= 4 when N allows, so the BlockSpec pipeline actually overlaps
    # input DMA / compute / writeback instead of collapsing to one step.
    target_steps = min(N, 4)
    nb = min(nb, _cdiv(N, target_steps))
    if block_n is not None:
        nb = min(nb, block_n)
    nb = max(int(nb), 1)
    # Prefer nb*L a multiple of 256 (v6e/v7x MXU is 256x256) when it is free.
    if L % 256 != 0:
        g = 256 // math.gcd(L, 256)
        if nb >= g:
            nb = (nb // g) * g
    return nb


@functools.partial(jax.jit, static_argnames=("block_n", "matmul_dtype"))
def convblock_forward(x, params, *, block_n=None, matmul_dtype=jnp.float32):
    """x: (N, L, Cin) float32 -> (N, L, Cout).

    matmul_dtype=jnp.bfloat16 runs the two convolutions natively on the MXU
    (f32 accumulation); LayerNorm / LeakyReLU math stays f32 (v5e-safe).
    """
    N, L, Cin = x.shape
    w1, b1, g1, be1, w2, b2, g2, be2 = params
    Cout = w1.shape[2]
    assert L >= PAD + 1, "ReflectionPad1d(2) requires L >= 3"
    # NOTE: L % 8 == 0 and Cout >= 128 is the sublane/lane-dense fast path;
    # other shapes stay correct but pay relayout / masked-store penalties.

    mmb = jnp.dtype(matmul_dtype).itemsize
    vmem_budget = int(_physical_vmem_bytes() * 0.75)   # ~48 MiB v7x, ~96 MiB v5e/v6e
    nb = _select_nb(N, L, Cin, Cout, mmb, vmem_budget, block_n)

    # Pad the batch to a multiple of nb with zero rows so no grid block ever
    # feeds out-of-bounds data to LayerNorm; padded rows are sliced off below.
    grid_n = _cdiv(N, nb)
    N_pad = grid_n * nb
    if N_pad != N:
        x = jnp.concatenate([x, jnp.zeros((N_pad - N, L, Cin), x.dtype)], axis=0)

    # im2col weight layout: (K, Cin, Cout) -> (K*Cin, Cout); cast once here so
    # the in-kernel matmuls run in bf16 when requested.
    w1m = w1.reshape(K * Cin, Cout).astype(matmul_dtype)
    w2m = w2.reshape(K * Cout, Cout).astype(matmul_dtype)

    Lp = _round_up(L + 2 * PAD, 8)      # explicit 8-sublane scratch extent
    Cmax = max(Cin, Cout)

    grid_spec = pltpu.PrefetchScalarGridSpec(
        num_scalar_prefetch=0,
        grid=(grid_n,),
        in_specs=[
            pl.BlockSpec((nb, L, Cin), lambda n: (n, 0, 0)),
            # Constant-index operands (weights / bias / LN affine). Their
            # duplicate pipeline buffer is charged in _select_nb's budget.
            pl.BlockSpec((K * Cin, Cout), lambda n: (0, 0)),
            pl.BlockSpec((1, Cout), lambda n: (0, 0)),
            pl.BlockSpec((1, Cout), lambda n: (0, 0)),
            pl.BlockSpec((1, Cout), lambda n: (0, 0)),
            pl.BlockSpec((K * Cout, Cout), lambda n: (0, 0)),
            pl.BlockSpec((1, Cout), lambda n: (0, 0)),
            pl.BlockSpec((1, Cout), lambda n: (0, 0)),
            pl.BlockSpec((1, Cout), lambda n: (0, 0)),
        ],
        # NOTE: Cout >= 128 gives lane-dense (unmasked) output stores; with
        # smaller Cout the store is masked (correct, slower).
        out_specs=pl.BlockSpec((nb, L, Cout), lambda n: (n, 0, 0)),
        scratch_shapes=[pltpu.VMEM((nb, Lp, Cmax), matmul_dtype)],
    )

    flops = 2 * N_pad * L * K * (Cin + Cout) * Cout
    bytes_accessed = (N_pad * L * (Cin + Cout) * 4
                      + (K * Cin * Cout + K * Cout * Cout) * mmb
                      + 6 * Cout * 4)
    cost = pl.CostEstimate(flops=flops,
                           transcendentals=2 * N_pad * L,   # one rsqrt per LN row
                           bytes_accessed=bytes_accessed)

    out = pl.pallas_call(
        convblock_kernel,
        out_shape=jax.ShapeDtypeStruct((N_pad, L, Cout), x.dtype),
        grid_spec=grid_spec,
        compiler_params=pltpu.CompilerParams(
            dimension_semantics=("parallel",),
            vmem_limit_bytes=vmem_budget),
        cost_estimate=cost,
    )(x, w1m, b1, g1, be1, w2m, b2, g2, be2)
    return out[:N] if N_pad != N else out


def init_params(key, input_size, channels):
    """Deterministic parameter init mirroring the PyTorch module."""
    k1, k2, k3, k4 = jax.random.split(key, 4)
    fan_in1 = input_size * K
    fan_in2 = channels * K
    # PyTorch conv weight layout is (Cout, Cin, K); store tap-major (K, Cin, Cout)
    w1 = jax.random.normal(k1, (K, input_size, channels), jnp.float32) * jnp.sqrt(
        2.0 / fan_in1)
    w2 = jax.random.normal(k2, (K, channels, channels), jnp.float32) * jnp.sqrt(
        2.0 / fan_in2)
    b1 = jax.random.uniform(k3, (1, channels), jnp.float32,
                            -1.0 / jnp.sqrt(fan_in1), 1.0 / jnp.sqrt(fan_in1))
    b2 = jax.random.uniform(k4, (1, channels), jnp.float32,
                            -1.0 / jnp.sqrt(fan_in2), 1.0 / jnp.sqrt(fan_in2))
    g1 = jnp.ones((1, channels), jnp.float32)
    be1 = jnp.zeros((1, channels), jnp.float32)
    g2 = jnp.ones((1, channels), jnp.float32)
    be2 = jnp.zeros((1, channels), jnp.float32)
    return (w1, b1, g1, be1, w2, b2, g2, be2)


def reference_forward(x, params):
    """Pure-JAX reference (lax.conv) for a correctness cross-check."""
    w1, b1, g1, be1, w2, b2, g2, be2 = params

    def conv1d_reflect(h_nlc, w_kio, b):
        h_ncl = jnp.transpose(h_nlc, (0, 2, 1))
        h_ncl = jnp.pad(h_ncl, ((0, 0), (0, 0), (PAD, PAD)), mode="reflect")
        w_oik = jnp.transpose(w_kio, (2, 1, 0))  # (Cout, Cin, K)
        y = lax.conv_general_dilated(
            h_ncl, w_oik, window_strides=(1,), padding="VALID",
            dimension_numbers=("NCH", "OIH", "NCH"))
        y = jnp.transpose(y, (0, 2, 1)) + b[None]  # (N, L, Cout)
        return y

    h = conv1d_reflect(x, w1, b1)
    h = _leaky_relu(_layernorm(h, g1[None], be1[None]))
    h = conv1d_reflect(h, w2, b2)
    h = _leaky_relu(_layernorm(h, g2[None], be2[None]))
    return h


if __name__ == "__main__":
    N, L, Cin, Cout = 2, 16, 4, 8   # batch, seq length, input_size, channels

    key = jax.random.PRNGKey(0)
    kx, kp = jax.random.split(key)
    x = jax.random.normal(kx, (N, L, Cin), jnp.float32)
    params = init_params(kp, Cin, Cout)

    # f32-matmul path: exact check against the pure-JAX reference.
    out = jax.block_until_ready(convblock_forward(x, params))
    ref = reference_forward(x, params)
    assert out.shape == (N, L, Cout)
    assert jnp.allclose(out, ref, atol=1e-4, rtol=1e-4), (
        float(jnp.max(jnp.abs(out - ref))))

    # bf16 MXU path (production default on v5e/v6e/v7x): f32 accumulation,
    # looser tolerance for the bf16 input rounding.
    out_bf16 = jax.block_until_ready(
        convblock_forward(x, params, matmul_dtype=jnp.bfloat16))
    assert jnp.allclose(out_bf16, ref, atol=1e-1, rtol=1e-1), (
        float(jnp.max(jnp.abs(out_bf16 - ref))))

    print("KERNEL_OK")
</pallas_src>

<mosaic_0001>
module attributes {stable_mosaic.version = 11 : i64} {
  func.func @convblock_kernel(%arg0: i32, %arg1: memref<1x16x4xf32, #tpu.memory_space<vmem>>, %arg2: memref<20x8xf32, #tpu.memory_space<vmem>>, %arg3: memref<1x8xf32, #tpu.memory_space<vmem>>, %arg4: memref<1x8xf32, #tpu.memory_space<vmem>>, %arg5: memref<1x8xf32, #tpu.memory_space<vmem>>, %arg6: memref<40x8xf32, #tpu.memory_space<vmem>>, %arg7: memref<1x8xf32, #tpu.memory_space<vmem>>, %arg8: memref<1x8xf32, #tpu.memory_space<vmem>>, %arg9: memref<1x8xf32, #tpu.memory_space<vmem>>, %arg10: memref<1x16x8xf32, #tpu.memory_space<vmem>>, %arg11: memref<1x24x8xf32, #tpu.memory_space<vmem>>) attributes {dimension_semantics = [#tpu.dimension_semantics<parallel>], iteration_bounds = array<i64: 2>, scalar_prefetch = 0 : i64, scratch_operands = 1 : i64, tpu.core_type = #tpu.core_type<tc>, window_params = [{transform_indices = @transform_0, window_bounds = array<i64: 1, 16, 4>}, {pipeline_mode = #tpu.pipeline_mode<synchronous>, transform_indices = @transform_1, window_bounds = array<i64: 20, 8>}, {pipeline_mode = #tpu.pipeline_mode<synchronous>, transform_indices = @transform_2, window_bounds = array<i64: 1, 8>}, {pipeline_mode = #tpu.pipeline_mode<synchronous>, transform_indices = @transform_3, window_bounds = array<i64: 1, 8>}, {pipeline_mode = #tpu.pipeline_mode<synchronous>, transform_indices = @transform_4, window_bounds = array<i64: 1, 8>}, {pipeline_mode = #tpu.pipeline_mode<synchronous>, transform_indices = @transform_5, window_bounds = array<i64: 40, 8>}, {pipeline_mode = #tpu.pipeline_mode<synchronous>, transform_indices = @transform_6, window_bounds = array<i64: 1, 8>}, {pipeline_mode = #tpu.pipeline_mode<synchronous>, transform_indices = @transform_7, window_bounds = array<i64: 1, 8>}, {pipeline_mode = #tpu.pipeline_mode<synchronous>, transform_indices = @transform_8, window_bounds = array<i64: 1, 8>}, {transform_indices = @transform_9, window_bounds = array<i64: 1, 16, 8>}]} {
    %c0 = arith.constant 0 : index
    %c0_0 = arith.constant 0 : index
    %c0_1 = arith.constant 0 : index
    %0 = vector.load %arg1[%c0, %c0_0, %c0_1] : memref<1x16x4xf32, #tpu.memory_space<vmem>>, vector<1x16x4xf32>
    %c0_2 = arith.constant 0 : index
    %c2 = arith.constant 2 : index
    %c0_3 = arith.constant 0 : index
    %1 = vector.load %arg11[%c0_2, %c2, %c0_3] : memref<1x24x8xf32, #tpu.memory_space<vmem>>, vector<1x16x4xf32>
    tpu.vector_store %arg11[%c0_2, %c2, %c0_3], %0 {strides = array<i32>} : memref<1x24x8xf32, #tpu.memory_space<vmem>>, vector<1x16x4xf32>,
    %c0_4 = arith.constant 0 : index
    %c2_5 = arith.constant 2 : index
    %c0_6 = arith.constant 0 : index
    %2 = vector.load %arg1[%c0_4, %c2_5, %c0_6] : memref<1x16x4xf32, #tpu.memory_space<vmem>>, vector<1x1x4xf32>
    %c0_7 = arith.constant 0 : index
    %c0_8 = arith.constant 0 : index
    %c0_9 = arith.constant 0 : index
    %3 = vector.load %arg11[%c0_7, %c0_8, %c0_9] : memref<1x24x8xf32, #tpu.memory_space<vmem>>, vector<1x1x4xf32>
    tpu.vector_store %arg11[%c0_7, %c0_8, %c0_9], %2 {strides = array<i32>} : memref<1x24x8xf32, #tpu.memory_space<vmem>>, vector<1x1x4xf32>,
    %c0_10 = arith.constant 0 : index
    %c1 = arith.constant 1 : index
    %c0_11 = arith.constant 0 : index
    %4 = vector.load %arg1[%c0_10, %c1, %c0_11] : memref<1x16x4xf32, #tpu.memory_space<vmem>>, vector<1x1x4xf32>
    %c0_12 = arith.constant 0 : index
    %c1_13 = arith.constant 1 : index
    %c0_14 = arith.constant 0 : index
    %5 = vector.load %arg11[%c0_12, %c1_13, %c0_14] : memref<1x24x8xf32, #tpu.memory_space<vmem>>, vector<1x1x4xf32>
    tpu.vector_store %arg11[%c0_12, %c1_13, %c0_14], %4 {strides = array<i32>} : memref<1x24x8xf32, #tpu.memory_space<vmem>>, vector<1x1x4xf32>,
    %c0_15 = arith.constant 0 : index
    %c14 = arith.constant 14 : index
    %c0_16 = arith.constant 0 : index
    %6 = vector.load %arg1[%c0_15, %c14, %c0_16] : memref<1x16x4xf32, #tpu.memory_space<vmem>>, vector<1x1x4xf32>
    %c0_17 = arith.constant 0 : index
    %c18 = arith.constant 18 : index
    %c0_18 = arith.constant 0 : index
    %7 = vector.load %arg11[%c0_17, %c18, %c0_18] : memref<1x24x8xf32, #tpu.memory_space<vmem>>, vector<1x1x4xf32>
    tpu.vector_store %arg11[%c0_17, %c18, %c0_18], %6 {strides = array<i32>} : memref<1x24x8xf32, #tpu.memory_space<vmem>>, vector<1x1x4xf32>,
    %c0_19 = arith.constant 0 : index
    %c13 = arith.constant 13 : index
    %c0_20 = arith.constant 0 : index
    %8 = vector.load %arg1[%c0_19, %c13, %c0_20] : memref<1x16x4xf32, #tpu.memory_space<vmem>>, vector<1x1x4xf32>
    %c0_21 = arith.constant 0 : index
    %c19 = arith.constant 19 : index
    %c0_22 = arith.constant 0 : index
    %9 = vector.load %arg11[%c0_21, %c19, %c0_22] : memref<1x24x8xf32, #tpu.memory_space<vmem>>, vector<1x1x4xf32>
    tpu.vector_store %arg11[%c0_21, %c19, %c0_22], %8 {strides = array<i32>} : memref<1x24x8xf32, #tpu.memory_space<vmem>>, vector<1x1x4xf32>,
    %c0_23 = arith.constant 0 : index
    %c0_24 = arith.constant 0 : index
    %c0_25 = arith.constant 0 : index
    %10 = vector.load %arg11[%c0_23, %c0_24, %c0_25] : memref<1x24x8xf32, #tpu.memory_space<vmem>>, vector<1x16x4xf32>
    %c0_26 = arith.constant 0 : index
    %c1_27 = arith.constant 1 : index
    %c0_28 = arith.constant 0 : index
    %11 = vector.load %arg11[%c0_26, %c1_27, %c0_28] : memref<1x24x8xf32, #tpu.memory_space<vmem>>, vector<1x16x4xf32>
    %c0_29 = arith.constant 0 : index
    %c2_30 = arith.constant 2 : index
    %c0_31 = arith.constant 0 : index
    %12 = vector.load %arg11[%c0_29, %c2_30, %c0_31] : memref<1x24x8xf32, #tpu.memory_space<vmem>>, vector<1x16x4xf32>
    %c0_32 = arith.constant 0 : index
    %c3 = arith.constant 3 : index
    %c0_33 = arith.constant 0 : index
    %13 = vector.load %arg11[%c0_32, %c3, %c0_33] : memref<1x24x8xf32, #tpu.memory_space<vmem>>, vector<1x16x4xf32>
    %c0_34 = arith.constant 0 : index
    %c4 = arith.constant 4 : index
    %c0_35 = arith.constant 0 : index
    %14 = vector.load %arg11[%c0_34, %c4, %c0_35] : memref<1x24x8xf32, #tpu.memory_space<vmem>>, vector<1x16x4xf32>
    %15 = tpu.concatenate %10, %11, %12, %13, %14 in 2 : vector<1x16x4xf32>, vector<1x16x4xf32>, vector<1x16x4xf32>, vector<1x16x4xf32>, vector<1x16x4xf32> -> vector<1x16x20xf32>
    %16 = vector.shape_cast %15 : vector<1x16x20xf32> to vector<16x20xf32>
    %c0_36 = arith.constant 0 : index
    %c0_37 = arith.constant 0 : index
    %17 = vector.load %arg2[%c0_36, %c0_37] : memref<20x8xf32, #tpu.memory_space<vmem>>, vector<20x8xf32>
    %cst = arith.constant dense<0.000000e+00> : vector<16x8xf32>
    %18 = tpu.matmul %16, %17, %cst {dimension_numbers = #tpu.dot_dimension_numbers<[1], [0], [0], [1], [0, 0, 1, 1], [], []>} : vector<16x20xf32>, vector<20x8xf32>, vector<16x8xf32> -> vector<16x8xf32>
    %c0_38 = arith.constant 0 : index
    %c0_39 = arith.constant 0 : index
    %19 = vector.load %arg3[%c0_38, %c0_39] : memref<1x8xf32, #tpu.memory_space<vmem>>, vector<1x8xf32>
    %20 = vector.broadcast %19 : vector<1x8xf32> to vector<16x8xf32>
    %21 = arith.addf %18, %20 : vector<16x8xf32>
    %c0_40 = arith.constant 0 : index
    %c0_41 = arith.constant 0 : index
    %22 = vector.load %arg4[%c0_40, %c0_41] : memref<1x8xf32, #tpu.memory_space<vmem>>, vector<1x8xf32>
    %c0_42 = arith.constant 0 : index
    %c0_43 = arith.constant 0 : index
    %23 = vector.load %arg5[%c0_42, %c0_43] : memref<1x8xf32, #tpu.memory_space<vmem>>, vector<1x8xf32>
    %cst_44 = arith.constant dense<0.000000e+00> : vector<16xf32>
    %24 = vector.multi_reduction <add>, %21, %cst_44 [1] : vector<16x8xf32> to vector<16xf32>
    %25 = vector.shape_cast %24 : vector<16xf32> to vector<16x1xf32>
    %cst_45 = arith.constant 8.000000e+00 : f32
    %26 = vector.broadcast %cst_45 : f32 to vector<16x1xf32>
    %27 = arith.divf %25, %26 : vector<16x1xf32>
    %28 = vector.broadcast %27 : vector<16x1xf32> to vector<16x8xf32>
    %29 = arith.subf %21, %28 : vector<16x8xf32>
    %30 = arith.mulf %29, %29 : vector<16x8xf32>
    %cst_46 = arith.constant dense<0.000000e+00> : vector<16xf32>
    %31 = vector.multi_reduction <add>, %30, %cst_46 [1] : vector<16x8xf32> to vector<16xf32>
    %32 = vector.shape_cast %31 : vector<16xf32> to vector<16x1xf32>
    %cst_47 = arith.constant 8.000000e+00 : f32
    %33 = vector.broadcast %cst_47 : f32 to vector<16x1xf32>
    %34 = arith.divf %32, %33 : vector<16x1xf32>
    %cst_48 = arith.constant 9.99999974E-6 : f32
    %35 = vector.broadcast %cst_48 : f32 to vector<16x1xf32>
    %36 = arith.addf %34, %35 : vector<16x1xf32>
    %37 = math.rsqrt %36 : vector<16x1xf32>
    %38 = vector.broadcast %37 : vector<16x1xf32> to vector<16x8xf32>
    %39 = arith.mulf %29, %38 : vector<16x8xf32>
    %40 = vector.broadcast %22 : vector<1x8xf32> to vector<16x8xf32>
    %41 = arith.mulf %39, %40 : vector<16x8xf32>
    %42 = vector.broadcast %23 : vector<1x8xf32> to vector<16x8xf32>
    %43 = arith.addf %41, %42 : vector<16x8xf32>
    %cst_49 = arith.constant 0.000000e+00 : f32
    %44 = vector.broadcast %cst_49 : f32 to vector<16x8xf32>
    %45 = arith.cmpf oge, %43, %44 : vector<16x8xf32>
    %cst_50 = arith.constant 0.00999999977 : f32
    %46 = vector.broadcast %cst_50 : f32 to vector<16x8xf32>
    %47 = arith.mulf %46, %43 : vector<16x8xf32>
    %48 = arith.select %45, %43, %47 : vector<16x8xi1>, vector<16x8xf32>
    %49 = vector.shape_cast %48 : vector<16x8xf32> to vector<1x16x8xf32>
    %c0_51 = arith.constant 0 : index
    %c2_52 = arith.constant 2 : index
    %c0_53 = arith.constant 0 : index
    %50 = vector.load %arg11[%c0_51, %c2_52, %c0_53] : memref<1x24x8xf32, #tpu.memory_space<vmem>>, vector<1x16x8xf32>
    tpu.vector_store %arg11[%c0_51, %c2_52, %c0_53], %49 {strides = array<i32>} : memref<1x24x8xf32, #tpu.memory_space<vmem>>, vector<1x16x8xf32>,
    %51 = vector.extract_strided_slice %49 {offsets = [0, 2, 0], sizes = [1, 1, 8], strides = [1, 1, 1]} : vector<1x16x8xf32> to vector<1x1x8xf32>
    %c0_54 = arith.constant 0 : index
    %c0_55 = arith.constant 0 : index
    %c0_56 = arith.constant 0 : index
    %52 = vector.load %arg11[%c0_54, %c0_55, %c0_56] : memref<1x24x8xf32, #tpu.memory_space<vmem>>, vector<1x1x8xf32>
    tpu.vector_store %arg11[%c0_54, %c0_55, %c0_56], %51 {strides = array<i32>} : memref<1x24x8xf32, #tpu.memory_space<vmem>>, vector<1x1x8xf32>,
    %53 = vector.extract_strided_slice %49 {offsets = [0, 1, 0], sizes = [1, 1, 8], strides = [1, 1, 1]} : vector<1x16x8xf32> to vector<1x1x8xf32>
    %c0_57 = arith.constant 0 : index
    %c1_58 = arith.constant 1 : index
    %c0_59 = arith.constant 0 : index
    %54 = vector.load %arg11[%c0_57, %c1_58, %c0_59] : memref<1x24x8xf32, #tpu.memory_space<vmem>>, vector<1x1x8xf32>
    tpu.vector_store %arg11[%c0_57, %c1_58, %c0_59], %53 {strides = array<i32>} : memref<1x24x8xf32, #tpu.memory_space<vmem>>, vector<1x1x8xf32>,
    %55 = vector.extract_strided_slice %49 {offsets = [0, 14, 0], sizes = [1, 1, 8], strides = [1, 1, 1]} : vector<1x16x8xf32> to vector<1x1x8xf32>
    %c0_60 = arith.constant 0 : index
    %c18_61 = arith.constant 18 : index
    %c0_62 = arith.constant 0 : index
    %56 = vector.load %arg11[%c0_60, %c18_61, %c0_62] : memref<1x24x8xf32, #tpu.memory_space<vmem>>, vector<1x1x8xf32>
    tpu.vector_store %arg11[%c0_60, %c18_61, %c0_62], %55 {strides = array<i32>} : memref<1x24x8xf32, #tpu.memory_space<vmem>>, vector<1x1x8xf32>,
    %57 = vector.extract_strided_slice %49 {offsets = [0, 13, 0], sizes = [1, 1, 8], strides = [1, 1, 1]} : vector<1x16x8xf32> to vector<1x1x8xf32>
    %c0_63 = arith.constant 0 : index
    %c19_64 = arith.constant 19 : index
    %c0_65 = arith.constant 0 : index
    %58 = vector.load %arg11[%c0_63, %c19_64, %c0_65] : memref<1x24x8xf32, #tpu.memory_space<vmem>>, vector<1x1x8xf32>
    tpu.vector_store %arg11[%c0_63, %c19_64, %c0_65], %57 {strides = array<i32>} : memref<1x24x8xf32, #tpu.memory_space<vmem>>, vector<1x1x8xf32>,
    %c0_66 = arith.constant 0 : index
    %c0_67 = arith.constant 0 : index
    %c0_68 = arith.constant 0 : index
    %59 = vector.load %arg11[%c0_66, %c0_67, %c0_68] : memref<1x24x8xf32, #tpu.memory_space<vmem>>, vector<1x16x8xf32>
    %c0_69 = arith.constant 0 : index
    %c1_70 = arith.constant 1 : index
    %c0_71 = arith.constant 0 : index
    %60 = vector.load %arg11[%c0_69, %c1_70, %c0_71] : memref<1x24x8xf32, #tpu.memory_space<vmem>>, vector<1x16x8xf32>
    %c0_72 = arith.constant 0 : index
    %c2_73 = arith.constant 2 : index
    %c0_74 = arith.constant 0 : index
    %61 = vector.load %arg11[%c0_72, %c2_73, %c0_74] : memref<1x24x8xf32, #tpu.memory_space<vmem>>, vector<1x16x8xf32>
    %c0_75 = arith.constant 0 : index
    %c3_76 = arith.constant 3 : index
    %c0_77 = arith.constant 0 : index
    %62 = vector.load %arg11[%c0_75, %c3_76, %c0_77] : memref<1x24x8xf32, #tpu.memory_space<vmem>>, vector<1x16x8xf32>
    %c0_78 = arith.constant 0 : index
    %c4_79 = arith.constant 4 : index
    %c0_80 = arith.constant 0 : index
    %63 = vector.load %arg11[%c0_78, %c4_79, %c0_80] : memref<1x24x8xf32, #tpu.memory_space<vmem>>, vector<1x16x8xf32>
    %64 = tpu.concatenate %59, %60, %61, %62, %63 in 2 : vector<1x16x8xf32>, vector<1x16x8xf32>, vector<1x16x8xf32>, vector<1x16x8xf32>, vector<1x16x8xf32> -> vector<1x16x40xf32>
    %65 = vector.shape_cast %64 : vector<1x16x40xf32> to vector<16x40xf32>
    %c0_81 = arith.constant 0 : index
    %c0_82 = arith.constant 0 : index
    %66 = vector.load %arg6[%c0_81, %c0_82] : memref<40x8xf32, #tpu.memory_space<vmem>>, vector<40x8xf32>
    %cst_83 = arith.constant dense<0.000000e+00> : vector<16x8xf32>
    %67 = tpu.matmul %65, %66, %cst_83 {dimension_numbers = #tpu.dot_dimension_numbers<[1], [0], [0], [1], [0, 0, 1, 1], [], []>} : vector<16x40xf32>, vector<40x8xf32>, vector<16x8xf32> -> vector<16x8xf32>
    %c0_84 = arith.constant 0 : index
    %c0_85 = arith.constant 0 : index
    %68 = vector.load %arg7[%c0_84, %c0_85] : memref<1x8xf32, #tpu.memory_space<vmem>>, vector<1x8xf32>
    %69 = vector.broadcast %68 : vector<1x8xf32> to vector<16x8xf32>
    %70 = arith.addf %67, %69 : vector<16x8xf32>
    %c0_86 = arith.constant 0 : index
    %c0_87 = arith.constant 0 : index
    %71 = vector.load %arg8[%c0_86, %c0_87] : memref<1x8xf32, #tpu.memory_space<vmem>>, vector<1x8xf32>
    %c0_88 = arith.constant 0 : index
    %c0_89 = arith.constant 0 : index
    %72 = vector.load %arg9[%c0_88, %c0_89] : memref<1x8xf32, #tpu.memory_space<vmem>>, vector<1x8xf32>
    %cst_90 = arith.constant dense<0.000000e+00> : vector<16xf32>
    %73 = vector.multi_reduction <add>, %70, %cst_90 [1] : vector<16x8xf32> to vector<16xf32>
    %74 = vector.shape_cast %73 : vector<16xf32> to vector<16x1xf32>
    %cst_91 = arith.constant 8.000000e+00 : f32
    %75 = vector.broadcast %cst_91 : f32 to vector<16x1xf32>
    %76 = arith.divf %74, %75 : vector<16x1xf32>
    %77 = vector.broadcast %76 : vector<16x1xf32> to vector<16x8xf32>
    %78 = arith.subf %70, %77 : vector<16x8xf32>
    %79 = arith.mulf %78, %78 : vector<16x8xf32>
    %cst_92 = arith.constant dense<0.000000e+00> : vector<16xf32>
    %80 = vector.multi_reduction <add>, %79, %cst_92 [1] : vector<16x8xf32> to vector<16xf32>
    %81 = vector.shape_cast %80 : vector<16xf32> to vector<16x1xf32>
    %cst_93 = arith.constant 8.000000e+00 : f32
    %82 = vector.broadcast %cst_93 : f32 to vector<16x1xf32>
    %83 = arith.divf %81, %82 : vector<16x1xf32>
    %cst_94 = arith.constant 9.99999974E-6 : f32
    %84 = vector.broadcast %cst_94 : f32 to vector<16x1xf32>
    %85 = arith.addf %83, %84 : vector<16x1xf32>
    %86 = math.rsqrt %85 : vector<16x1xf32>
    %87 = vector.broadcast %86 : vector<16x1xf32> to vector<16x8xf32>
    %88 = arith.mulf %78, %87 : vector<16x8xf32>
    %89 = vector.broadcast %71 : vector<1x8xf32> to vector<16x8xf32>
    %90 = arith.mulf %88, %89 : vector<16x8xf32>
    %91 = vector.broadcast %72 : vector<1x8xf32> to vector<16x8xf32>
    %92 = arith.addf %90, %91 : vector<16x8xf32>
    %cst_95 = arith.constant 0.000000e+00 : f32
    %93 = vector.broadcast %cst_95 : f32 to vector<16x8xf32>
    %94 = arith.cmpf oge, %92, %93 : vector<16x8xf32>
    %cst_96 = arith.constant 0.00999999977 : f32
    %95 = vector.broadcast %cst_96 : f32 to vector<16x8xf32>
    %96 = arith.mulf %95, %92 : vector<16x8xf32>
    %97 = arith.select %94, %92, %96 : vector<16x8xi1>, vector<16x8xf32>
    %98 = vector.shape_cast %97 : vector<16x8xf32> to vector<1x16x8xf32>
    %c0_97 = arith.constant 0 : index
    %c0_98 = arith.constant 0 : index
    %c0_99 = arith.constant 0 : index
    %99 = vector.load %arg10[%c0_97, %c0_98, %c0_99] : memref<1x16x8xf32, #tpu.memory_space<vmem>>, vector<1x16x8xf32>
    tpu.vector_store %arg10[%c0_97, %c0_98, %c0_99], %98 {strides = array<i32>} : memref<1x16x8xf32, #tpu.memory_space<vmem>>, vector<1x16x8xf32>,
    return
  }
  func.func @transform_0(%arg0: i32) -> (i32, i32, i32) {
    %c0_i32 = arith.constant 0 : i32
    %c0_i32_0 = arith.constant 0 : i32
    %c0_i32_1 = arith.constant 0 : i32
    return %arg0, %c0_i32, %c0_i32_0 : i32, i32, i32
  }
  func.func @transform_1(%arg0: i32) -> (i32, i32) {
    %c0_i32 = arith.constant 0 : i32
    %c0_i32_0 = arith.constant 0 : i32
    %c0_i32_1 = arith.constant 0 : i32
    return %c0_i32, %c0_i32_0 : i32, i32
  }
  func.func @transform_2(%arg0: i32) -> (i32, i32) {
    %c0_i32 = arith.constant 0 : i32
    %c0_i32_0 = arith.constant 0 : i32
    %c0_i32_1 = arith.constant 0 : i32
    return %c0_i32, %c0_i32_0 : i32, i32
  }
  func.func @transform_3(%arg0: i32) -> (i32, i32) {
    %c0_i32 = arith.constant 0 : i32
    %c0_i32_0 = arith.constant 0 : i32
    %c0_i32_1 = arith.constant 0 : i32
    return %c0_i32, %c0_i32_0 : i32, i32
  }
  func.func @transform_4(%arg0: i32) -> (i32, i32) {
    %c0_i32 = arith.constant 0 : i32
    %c0_i32_0 = arith.constant 0 : i32
    %c0_i32_1 = arith.constant 0 : i32
    return %c0_i32, %c0_i32_0 : i32, i32
  }
  func.func @transform_5(%arg0: i32) -> (i32, i32) {
    %c0_i32 = arith.constant 0 : i32
    %c0_i32_0 = arith.constant 0 : i32
    %c0_i32_1 = arith.constant 0 : i32
    return %c0_i32, %c0_i32_0 : i32, i32
  }
  func.func @transform_6(%arg0: i32) -> (i32, i32) {
    %c0_i32 = arith.constant 0 : i32
    %c0_i32_0 = arith.constant 0 : i32
    %c0_i32_1 = arith.constant 0 : i32
    return %c0_i32, %c0_i32_0 : i32, i32
  }
  func.func @transform_7(%arg0: i32) -> (i32, i32) {
    %c0_i32 = arith.constant 0 : i32
    %c0_i32_0 = arith.constant 0 : i32
    %c0_i32_1 = arith.constant 0 : i32
    return %c0_i32, %c0_i32_0 : i32, i32
  }
  func.func @transform_8(%arg0: i32) -> (i32, i32) {
    %c0_i32 = arith.constant 0 : i32
    %c0_i32_0 = arith.constant 0 : i32
    %c0_i32_1 = arith.constant 0 : i32
    return %c0_i32, %c0_i32_0 : i32, i32
  }
  func.func @transform_9(%arg0: i32) -> (i32, i32, i32) {
    %c0_i32 = arith.constant 0 : i32
    %c0_i32_0 = arith.constant 0 : i32
    %c0_i32_1 = arith.constant 0 : i32
    return %arg0, %c0_i32, %c0_i32_0 : i32, i32, i32
  }
}

</mosaic_0001>

<llo_original>
// kernel: convblock_forward.1
$region0: #{convblock_forward.1}
  #allocation0 [shape = 'u32[]', space=smem, size = 0x4, offset = 0x4, fixed_abs, tag = 'smem constant byte address 0x4 - core index']
  #allocation1 [shape = 'u32[72,128]{1,0:T(1,128)}', space=vmem, size = 0x9000, scoped, tag = 'internal scratch']
  #allocation2 [shape = 'f32[1,24,8]{2,1,0:T(8,128)}', space=vmem, size = 0x3000, scoped, tag = 'scratch operand']
  %s0 = inlined_call_operand.vmem [shape: f32[2,16,4], index: 0, kind: input, shape index: {}]
  %s1 = inlined_call_operand.vmem [shape: f32[20,8], index: 1, kind: input, shape index: {}]
  %s2 = inlined_call_operand.vmem [shape: f32[1,8], index: 2, kind: input, shape index: {}]
  %s3 = inlined_call_operand.vmem [shape: f32[1,8], index: 3, kind: input, shape index: {}]
  %s4 = inlined_call_operand.vmem [shape: f32[1,8], index: 4, kind: input, shape index: {}]
  %s5 = inlined_call_operand.vmem [shape: f32[40,8], index: 5, kind: input, shape index: {}]
  %s6 = inlined_call_operand.vmem [shape: f32[1,8], index: 6, kind: input, shape index: {}]
  %s7 = inlined_call_operand.vmem [shape: f32[1,8], index: 7, kind: input, shape index: {}]
  %s8 = inlined_call_operand.vmem [shape: f32[1,8], index: 8, kind: input, shape index: {}]
  %s9 = inlined_call_operand.vmem [shape: f32[2,16,8], index: 9, kind: output, shape index: {}]
  %s10 = sld [smem:[#allocation0]]
  $region69: #{convblock_forward.1} parent=0
    _
  %s12 = ssub.s32 1, %s10
  %s13 = scalar_select 0, %s12, %s10
  loop: start=0, step=1, limit=4
  $region2: #{convblock_forward.1} parent=0 // loop_pre_header
    _
  $region3: #{convblock_forward.1} parent=0 // loop_header
    %s15 = sphi 0, %s19
    %p16 = scmp.ge.s32.totalorder %s15, 4
    %s25 = sphi 0, %s27
    %s28 = sphi 0, %s25
    %s29 = sphi 0, %s28
    %s45 = sphi 0, %s29
    %s49 = sphi 0, %s49
    %s51 = sphi 0, %s49
    %s52 = sphi 0, %s51
    %s66 = sphi 0, %s52
    %s70 = sphi 0, %s70
    %s72 = sphi 0, %s70
    %s73 = sphi 0, %s72
    %s87 = sphi 0, %s73
    %s91 = sphi 0, %s91
    %s93 = sphi 0, %s91
    %s94 = sphi 0, %s93
    %s108 = sphi 0, %s94
    %s112 = sphi 0, %s112
    %s114 = sphi 0, %s112
    %s115 = sphi 0, %s114
    %s129 = sphi 0, %s115
    %s133 = sphi 0, %s133
    %s135 = sphi 0, %s133
    %s136 = sphi 0, %s135
    %s150 = sphi 0, %s136
    %s154 = sphi 0, %s154
    %s156 = sphi 0, %s154
    %s157 = sphi 0, %s156
    %s171 = sphi 0, %s157
    %s175 = sphi 0, %s175
    %s177 = sphi 0, %s175
    %s178 = sphi 0, %s177
    %s192 = sphi 0, %s178
    %s196 = sphi 0, %s196
    %s198 = sphi 0, %s196
    %s199 = sphi 0, %s198
    %s213 = sphi 0, %s199
    %s219 = sphi 0, %s221
    %s222 = sphi 0, %s219
    %s223 = sphi 0, %s222
    %s239 = sphi 0, %s223
  $region4: #{convblock_forward.1} parent=0 // loop_header_branch
    %18 = sbr.rel (%p16) target = $region8
  $region5: #{convblock_forward.1} parent=0 // loop_body
    %s20 = ssub.s32 %s15, 1
    %s21 = ssub.s32 %s15, 2
    %s22 = sadd.s32 %s15, 1
    %s23 = ssub.s32 %s15, %s22
    %p24 = scmp.eq.s32.totalorder %s23, 0
    %s26 = sadd.s32 %s25, 1
    %s27 = scalar_select %p24, %s25, %s26
    %p30 = pneg %p24
    %p31 = scmp.eq.s32.totalorder %s15, 1
    %p32 = por %p30, %p31
    %p33 = scmp.ne.s32.totalorder %s25, %s28
    %p34 = scmp.eq.s32.totalorder %s15, 0
    %p35 = por %p33, %p34
    %p36 = scmp.ne.s32.totalorder %s25, %s28
    %p37 = scmp.eq.s32.totalorder %s20, 1
    %p38 = por %p36, %p37
    %p39 = scmp.ne.s32.totalorder %s28, %s29
    %p40 = scmp.eq.s32.totalorder %s20, 0
    %p41 = por %p39, %p40
    %p42 = scmp.ne.s32.totalorder %s28, %s29
    %p43 = scmp.eq.s32.totalorder %s21, 1
    %p44 = por %p42, %p43
    %p46 = scmp.ne.s32.totalorder %s29, %s45
    %p47 = scmp.eq.s32.totalorder %s21, 0
    %p48 = por %p46, %p47
    %s50 = sadd.s32 %s49, 1
    %p53 = scmp.eq.s32.totalorder %s15, 1
    %p54 = scmp.ne.s32.totalorder %s49, %s51
    %p55 = scmp.eq.s32.totalorder %s15, 0
    %p56 = por %p54, %p55
    %p57 = scmp.ne.s32.totalorder %s49, %s51
    %p58 = scmp.eq.s32.totalorder %s20, 1
    %p59 = por %p57, %p58
    %p60 = scmp.ne.s32.totalorder %s51, %s52
    %p61 = scmp.eq.s32.totalorder %s20, 0
    %p62 = por %p60, %p61
    %p63 = scmp.ne.s32.totalorder %s51, %s52
    %p64 = scmp.eq.s32.totalorder %s21, 1
    %p65 = por %p63, %p64
    %p67 = scmp.ne.s32.totalorder %s52, %s66
    %p68 = scmp.eq.s32.totalorder %s21, 0
    %p69 = por %p67, %p68
    %s71 = sadd.s32 %s70, 1
    %p74 = scmp.eq.s32.totalorder %s15, 1
    %p75 = scmp.ne.s32.totalorder %s70, %s72
    %p76 = scmp.eq.s32.totalorder %s15, 0
    %p77 = por %p75, %p76
    %p78 = scmp.ne.s32.totalorder %s70, %s72
    %p79 = scmp.eq.s32.totalorder %s20, 1
    %p80 = por %p78, %p79
    %p81 = scmp.ne.s32.totalorder %s72, %s73
    %p82 = scmp.eq.s32.totalorder %s20, 0
    %p83 = por %p81, %p82
    %p84 = scmp.ne.s32.totalorder %s72, %s73
    %p85 = scmp.eq.s32.totalorder %s21, 1
    %p86 = por %p84, %p85
    %p88 = scmp.ne.s32.totalorder %s73, %s87
    %p89 = scmp.eq.s32.totalorder %s21, 0
    %p90 = por %p88, %p89
    %s92 = sadd.s32 %s91, 1
    %p95 = scmp.eq.s32.totalorder %s15, 1
    %p96 = scmp.ne.s32.totalorder %s91, %s93
    %p97 = scmp.eq.s32.totalorder %s15, 0
    %p98 = por %p96, %p97
    %p99 = scmp.ne.s32.totalorder %s91, %s93
    %p100 = scmp.eq.s32.totalorder %s20, 1
    %p101 = por %p99, %p100
    %p102 = scmp.ne.s32.totalorder %s93, %s94
    %p103 = scmp.eq.s32.totalorder %s20, 0
    %p104 = por %p102, %p103
    %p105 = scmp.ne.s32.totalorder %s93, %s94
    %p106 = scmp.eq.s32.totalorder %s21, 1
    %p107 = por %p105, %p106
    %p109 = scmp.ne.s32.totalorder %s94, %s108
    %p110 = scmp.eq.s32.totalorder %s21, 0
    %p111 = por %p109, %p110
    %s113 = sadd.s32 %s112, 1
    %p116 = scmp.eq.s32.totalorder %s15, 1
    %p117 = scmp.ne.s32.totalorder %s112, %s114
    %p118 = scmp.eq.s32.totalorder %s15, 0
    %p119 = por %p117, %p118
    %p120 = scmp.ne.s32.totalorder %s112, %s114
    %p121 = scmp.eq.s32.totalorder %s20, 1
    %p122 = por %p120, %p121
    %p123 = scmp.ne.s32.totalorder %s114, %s115
    %p124 = scmp.eq.s32.totalorder %s20, 0
    %p125 = por %p123, %p124
    %p126 = scmp.ne.s32.totalorder %s114, %s115
    %p127 = scmp.eq.s32.totalorder %s21, 1
    %p128 = por %p126, %p127
    %p130 = scmp.ne.s32.totalorder %s115, %s129
    %p131 = scmp.eq.s32.totalorder %s21, 0
    %p132 = por %p130, %p131
    %s134 = sadd.s32 %s133, 1
    %p137 = scmp.eq.s32.totalorder %s15, 1
    %p138 = scmp.ne.s32.totalorder %s133, %s135
    %p139 = scmp.eq.s32.totalorder %s15, 0
    %p140 = por %p138, %p139
    %p141 = scmp.ne.s32.totalorder %s133, %s135
    %p142 = scmp.eq.s32.totalorder %s20, 1
    %p143 = por %p141, %p142
    %p144 = scmp.ne.s32.totalorder %s135, %s136
    %p145 = scmp.eq.s32.totalorder %s20, 0
    %p146 = por %p144, %p145
    %p147 = scmp.ne.s32.totalorder %s135, %s136
    %p148 = scmp.eq.s32.totalorder %s21, 1
    %p149 = por %p147, %p148
    %p151 = scmp.ne.s32.totalorder %s136, %s150
    %p152 = scmp.eq.s32.totalorder %s21, 0
    %p153 = por %p151, %p152
    %s155 = sadd.s32 %s154, 1
    %p158 = scmp.eq.s32.totalorder %s15, 1
    %p159 = scmp.ne.s32.totalorder %s154, %s156
    %p160 = scmp.eq.s32.totalorder %s15, 0
    %p161 = por %p159, %p160
    %p162 = scmp.ne.s32.totalorder %s154, %s156
    %p163 = scmp.eq.s32.totalorder %s20, 1
    %p164 = por %p162, %p163
    %p165 = scmp.ne.s32.totalorder %s156, %s157
    %p166 = scmp.eq.s32.totalorder %s20, 0
    %p167 = por %p165, %p166
    %p168 = scmp.ne.s32.totalorder %s156, %s157
    %p169 = scmp.eq.s32.totalorder %s21, 1
    %p170 = por %p168, %p169
    %p172 = scmp.ne.s32.totalorder %s157, %s171
    %p173 = scmp.eq.s32.totalorder %s21, 0
    %p174 = por %p172, %p173
    %s176 = sadd.s32 %s175, 1
    %p179 = scmp.eq.s32.totalorder %s15, 1
    %p180 = scmp.ne.s32.totalorder %s175, %s177
    %p181 = scmp.eq.s32.totalorder %s15, 0
    %p182 = por %p180, %p181
    %p183 = scmp.ne.s32.totalorder %s175, %s177
    %p184 = scmp.eq.s32.totalorder %s20, 1
    %p185 = por %p183, %p184
    %p186 = scmp.ne.s32.totalorder %s177, %s178
    %p187 = scmp.eq.s32.totalorder %s20, 0
    %p188 = por %p186, %p187
    %p189 = scmp.ne.s32.totalorder %s177, %s178
    %p190 = scmp.eq.s32.totalorder %s21, 1
    %p191 = por %p189, %p190
    %p193 = scmp.ne.s32.totalorder %s178, %s192
    %p194 = scmp.eq.s32.totalorder %s21, 0
    %p195 = por %p193, %p194
    %s197 = sadd.s32 %s196, 1
    %p200 = scmp.eq.s32.totalorder %s15, 1
    %p201 = scmp.ne.s32.totalorder %s196, %s198
    %p202 = scmp.eq.s32.totalorder %s15, 0
    %p203 = por %p201, %p202
    %p204 = scmp.ne.s32.totalorder %s196, %s198
    %p205 = scmp.eq.s32.totalorder %s20, 1
    %p206 = por %p204, %p205
    %p207 = scmp.ne.s32.totalorder %s198, %s199
    %p208 = scmp.eq.s32.totalorder %s20, 0
    %p209 = por %p207, %p208
    %p210 = scmp.ne.s32.totalorder %s198, %s199
    %p211 = scmp.eq.s32.totalorder %s21, 1
    %p212 = por %p210, %p211
    %p214 = scmp.ne.s32.totalorder %s199, %s213
    %p215 = scmp.eq.s32.totalorder %s21, 0
    %p216 = por %p214, %p215
    %s217 = ssub.s32 %s15, %s22
    %p218 = scmp.eq.s32.totalorder %s217, 0
    %s220 = sadd.s32 %s219, 1
    %s221 = scalar_select %p218, %s219, %s220
    %p224 = pneg %p218
    %p225 = scmp.eq.s32.totalorder %s15, 1
    %p226 = por %p224, %p225
    %p227 = scmp.ne.s32.totalorder %s219, %s222
    %p228 = scmp.eq.s32.totalorder %s15, 0
    %p229 = por %p227, %p228
    %p230 = scmp.ne.s32.totalorder %s219, %s222
    %p231 = scmp.eq.s32.totalorder %s20, 1
    %p232 = por %p230, %p231
    %p233 = scmp.ne.s32.totalorder %s222, %s223
    %p234 = scmp.eq.s32.totalorder %s20, 0
    %p235 = por %p233, %p234
    %p236 = scmp.ne.s32.totalorder %s222, %s223
    %p237 = scmp.eq.s32.totalorder %s21, 1
    %p238 = por %p236, %p237
    %p240 = scmp.ne.s32.totalorder %s223, %s239
    %p241 = scmp.eq.s32.totalorder %s21, 0
    %p242 = por %p240, %p241
    %p243 = scmp.le.s32.totalorder 1, %s15
    %p244 = scmp.lt.s32.totalorder %s15, 3
    %p245 = pnand %p243, %p244
    %p246 = pneg %p245
    // Predicated region
    $region9: #{convblock_forward.1} parent=5 // pred_check
      _
    $region10: #{convblock_forward.1} parent=5 // pred_check_branch
      %248 = sbr.rel (%p245) target = $region12
    $region11: #{convblock_forward.1} parent=5 // pred_region
      %s249 = ssub.s32 %s15, 1
      // Predicated region
      $region13: #{convblock_forward.1} parent=11 // pred_check
        %p250 = pneg %p62
      $region14: #{convblock_forward.1} parent=11 // pred_check_branch
        %252 = sbr.rel (%p250) target = $region16
      $region15: #{convblock_forward.1} parent=11 // pred_region
        _
      $region16: #{convblock_forward.1} parent=11 // pred_fallthru
        _
      // Predicated region
      $region17: #{convblock_forward.1} parent=11 // pred_check
        %p253 = pneg %p83
      $region18: #{convblock_forward.1} parent=11 // pred_check_branch
        %255 = sbr.rel (%p253) target = $region20
      $region19: #{convblock_forward.1} parent=11 // pred_region
        _
      $region20: #{convblock_forward.1} parent=11 // pred_fallthru
        _
      // Predicated region
      $region21: #{convblock_forward.1} parent=11 // pred_check
        %p256 = pneg %p104
      $region22: #{convblock_forward.1} parent=11 // pred_check_branch
        %258 = sbr.rel (%p256) target = $region24
      $region23: #{convblock_forward.1} parent=11 // pred_region
        _
      $region24: #{convblock_forward.1} parent=11 // pred_fallthru
        _
      // Predicated region
      $region25: #{convblock_forward.1} parent=11 // pred_check
        %p259 = pneg %p125
      $region26: #{convblock_forward.1} parent=11 // pred_check_branch
        %261 = sbr.rel (%p259) target = $region28
      $region27: #{convblock_forward.1} parent=11 // pred_region
        _
      $region28: #{convblock_forward.1} parent=11 // pred_fallthru
        _
      // Predicated region
      $region29: #{convblock_forward.1} parent=11 // pred_check
        %p262 = pneg %p146
      $region30: #{convblock_forward.1} parent=11 // pred_check_branch
        %264 = sbr.rel (%p262) target = $region32
      $region31: #{convblock_forward.1} parent=11 // pred_region
        _
      $region32: #{convblock_forward.1} parent=11 // pred_fallthru
        _
      // Predicated region
      $region33: #{convblock_forward.1} parent=11 // pred_check
        %p265 = pneg %p167
      $region34: #{convblock_forward.1} parent=11 // pred_check_branch
        %267 = sbr.rel (%p265) target = $region36
      $region35: #{convblock_forward.1} parent=11 // pred_region
        _
      $region36: #{convblock_forward.1} parent=11 // pred_fallthru
        _
      // Predicated region
      $region37: #{convblock_forward.1} parent=11 // pred_check
        %p268 = pneg %p188
      $region38: #{convblock_forward.1} parent=11 // pred_check_branch
        %270 = sbr.rel (%p268) target = $region40
      $region39: #{convblock_forward.1} parent=11 // pred_region
        _
      $region40: #{convblock_forward.1} parent=11 // pred_fallthru
        _
      // Predicated region
      $region41: #{convblock_forward.1} parent=11 // pred_check
        %p271 = pneg %p209
      $region42: #{convblock_forward.1} parent=11 // pred_check_branch
        %273 = sbr.rel (%p271) target = $region44
      $region43: #{convblock_forward.1} parent=11 // pred_region
        _
      $region44: #{convblock_forward.1} parent=11 // pred_fallthru
        _
    $region12: #{convblock_forward.1} parent=5 // pred_fallthru
      _
    %p274 = scmp.lt.s32.totalorder %s15, 2
    // Predicated region
    $region45: #{convblock_forward.1} parent=5 // pred_check
      %p275 = pneg %p274
    $region46: #{convblock_forward.1} parent=5 // pred_check_branch
      %277 = sbr.rel (%p275) target = $region48
    $region47: #{convblock_forward.1} parent=5 // pred_region
      // Predicated region
      $region49: #{convblock_forward.1} parent=47 // pred_check
        %p278 = pneg %p35
      $region50: #{convblock_forward.1} parent=47 // pred_check_branch
        %280 = sbr.rel (%p278) target = $region52
      $region51: #{convblock_forward.1} parent=47 // pred_region
        %p281 = scmp.lt.s32.totalorder %s15, 1
        %s282 = scalar_select %p281, %s15, 1
        %s283 = smul.addr %s282, 2
        %s284 = smul.addr %s283, 8
        %s285 = scalar_lea.vmem %s0, %s284
      $region52: #{convblock_forward.1} parent=47 // pred_fallthru
        _
    $region48: #{convblock_forward.1} parent=5 // pred_fallthru
      _
    %p286 = scmp.le.s32.totalorder 1, %s15
    %p287 = scmp.lt.s32.totalorder %s15, 3
    %p288 = pnand %p286, %p287
    %p289 = pneg %p288
    // Predicated region
    $region53: #{convblock_forward.1} parent=5 // pred_check
      _
    $region54: #{convblock_forward.1} parent=5 // pred_check_branch
      %291 = sbr.rel (%p288) target = $region56
    $region55: #{convblock_forward.1} parent=5 // pred_region
      %s292 = ssub.s32 %s15, 1
      %p293 = scmp.lt.s32.totalorder %s20, 1
      %s294 = scalar_select %p293, %s20, 1
      %s295 = smul.addr %s294, 2
      %s296 = smul.addr %s295, 8
      %s297 = scalar_lea.vmem %s0, %s296
      %p298 = pneg %p41
      %p299 = pneg %p38
      %p300 = pneg %p62
      %p301 = pneg %p59
      %p302 = pneg %p83
      %p303 = pneg %p80
      %p304 = pneg %p104
      %p305 = pneg %p101
      %p306 = pneg %p125
      %p307 = pneg %p122
      %p308 = pneg %p146
      %p309 = pneg %p143
      %p310 = pneg %p167
      %p311 = pneg %p164
      %p312 = pneg %p188
      %p313 = pneg %p185
      %p314 = pneg %p209
      %p315 = pneg %p206
      %p316 = pneg %p235
      %p317 = pneg %p232
      %p318 = scmp.lt.s32.totalorder %s20, 1
      %s319 = scalar_select %p318, %s20, 1
      %s320 = smul.addr %s319, 2
      %s321 = smul.addr %s320, 8
      %s322 = scalar_lea.vmem %s9, %s321
      %p323 = scmp.lt.s32.totalorder %s20, 1
      %s324 = scalar_select %p323, %s20, 1
      %s325 = smul.addr %s324, 2
      %s326 = smul.addr %s325, 8
      %s327 = scalar_lea.vmem %s0, %s326
      %p328 = scmp.lt.s32.totalorder %s20, 1
      %s329 = scalar_select %p328, %s20, 1
      %s330 = smul.addr %s329, 2
      %s331 = smul.addr %s330, 8
      %s332 = scalar_lea.vmem %s9, %s331
      %v333 = vld [vmem:[%s327] sm:$0xff]
      %v334 = vld [vmem:[%s327 + $0x8] sm:$0xff]
      %vm335 = vcmask 31744
      %336 = vst.msk [vmem:[#allocation2 + $0x2] sm:$0xff] %vm335, %v333
      %337 = vst.msk [vmem:[#allocation2 + $0xa] sm:$0xff] %vm335, %v334
      %v338 = vld [vmem:[%s327 + $0x2] sm:$0x1]
      %vm339 = vcmask 24576
      %340 = vst.msk [vmem:[#allocation2] sm:$0x1] %vm339, %v338
      %v341 = vld [vmem:[%s327 + $0x1] sm:$0x1]
      %342 = vst.msk [vmem:[#allocation2 + $0x1] sm:$0x1] %vm339, %v341
      %v343 = vld [vmem:[%s327 + $0xe] sm:$0x1]
      %344 = vst.msk [vmem:[#allocation2 + $0x12] sm:$0x1] %vm339, %v343
      %v345 = vld [vmem:[%s327 + $0xd] sm:$0x1]
      %346 = vst.msk [vmem:[#allocation2 + $0x13] sm:$0x1] %vm339, %v345
      %v347 = vld [vmem:[#allocation2] sm:$0xff]
      %v348 = vld [vmem:[#allocation2 + $0x8] sm:$0xff]
      %v349 = vld [vmem:[#allocation2 + $0x1] sm:$0xff]
      %v350 = vld [vmem:[#allocation2 + $0x9] sm:$0xff]
      %v351 = vld [vmem:[#allocation2 + $0x2] sm:$0xff]
      %v352 = vld [vmem:[#allocation2 + $0xa] sm:$0xff]
      %v353 = vld [vmem:[#allocation2 + $0x3] sm:$0xff]
      %v354 = vld [vmem:[#allocation2 + $0xb] sm:$0xff]
      %v355 = vld [vmem:[#allocation2 + $0x4] sm:$0xff]
      %v356 = vld [vmem:[#allocation2 + $0xc] sm:$0xff]
      %359 = vrot.lane.b32.xlu0 %v349, 4
      %v360 = vpop.permute.xlu0 %359
      %361 = vrot.lane.b32.xlu0 %v350, 4
      %v362 = vpop.permute.xlu0 %361
      %367 = vrot.lane.b32.xlu0 %v351, 8
      %v368 = vpop.permute.xlu0 %367
      %369 = vrot.lane.b32.xlu0 %v352, 8
      %v370 = vpop.permute.xlu0 %369
      %375 = vrot.lane.b32.xlu0 %v353, 12
      %v376 = vpop.permute.xlu0 %375
      %377 = vrot.lane.b32.xlu0 %v354, 12
      %v378 = vpop.permute.xlu0 %377
      %383 = vrot.lane.b32.xlu0 %v355, 16
      %v384 = vpop.permute.xlu0 %383
      %385 = vrot.lane.b32.xlu0 %v356, 16
      %v386 = vpop.permute.xlu0 %385
      %v389 = vsel %vm335, %v347, %v360
      %v390 = vsel %vm335, %v348, %v362
      %vm391 = vcmask 64512
      %v392 = vsel %vm391, %v389, %v368
      %v393 = vsel %vm391, %v390, %v370
      %vm394 = vcmask 97280
      %v395 = vsel %vm394, %v392, %v376
      %v396 = vsel %vm394, %v393, %v378
      %vm397 = vcmask 130048
      %v398 = vsel %vm397, %v395, %v384
      %v399 = vsel %vm397, %v396, %v386
      %v400 = vld [vmem:[%s1] sm:$0xff]
      %v401 = vld [vmem:[%s1 + $0x8] sm:$0xff]
      %v402 = vld [vmem:[%s1 + $0x10] sm:$0xf]
      %v403 = vld [vmem:[%s2] sm:$0x1]
      %v405 = vperm.slane %v403, 0
      %vm407 = vcmask 162816
      %v409 = vsel %vm407, %v398, 0
      %v412 = vsel %vm407, %v399, 0
      %vm414 = vcmask 1043456
      %v416 = vsel %vm414, %v402, 0
      %418 = vmatpush.msra.mxu0 0.0
      %419 = vmatpush.msra.mxu0 0.0
      %420 = vmatpush.msra.mxu0 0.0
      %421 = vmatpush.msra.mxu0 0.0
      %422 = vmatpush.msra.mxu0 0.0
      %423 = vmatpush.msra.mxu0 0.0
      %424 = vmatpush.msra.mxu0 0.0
      %425 = vmatpush.msra.mxu0 0.0
      %426 = vmatpush.msra.mxu0 0.0
      %427 = vmatpush.msra.mxu0 0.0
      %428 = vmatpush.msra.mxu0 0.0
      %429 = vmatpush.msra.mxu0 0.0
      %430 = vmatpush.msra.mxu0 0.0
      %431 = vmatpush.msra.mxu0 %v416
      %432 = vmatpush.msra.mxu0 %v401
      %433 = vmatpush.msra.mxu0 %v400
      %434 = vmatmul.f32.gmra.mxu0 %v409
      %v435 = vpop.f32.mrf.mxu0
      %v436 = vadd.f32 %v405, %v435
      %437 = vmatmul.f32.gmra.mxu0 %v412
      %v438 = vpop.f32.mrf.mxu0
      %v439 = vadd.f32 %v405, %v438
      %440 = vdwg.mxu0
      %v441 = vld [vmem:[%s3] sm:$0x1]
      %v442 = vld [vmem:[%s4] sm:$0x1]
      %v443 = vsel %vm391, %v436, 0.0
      %444 = vadd.xlane.f32.xlu0 %v443
      %v445 = vpop.xlane.xlu0 %444
      %v446 = vsel %vm391, %v439, 0.0
      %447 = vadd.xlane.f32.xlu0 %v446
      %v448 = vpop.xlane.xlu0 %447
      %v449 = vrcp.pop 8.0
      %v450 = vmul.f32 8.0, %v449
      %v451 = vsub.f32 1.0, %v450
      %v452 = vmul.f32 %v449, %v451
      %v453 = vadd.f32 %v449, %v452
      %vm454 = vweird.f32 %v449
      %v455 = vsel %vm454, %v449, %v453
      %v456 = vmul.f32 %v445, %v455
      %v457 = vmul.f32 %v448, %v455
      %v458 = vsub.f32 %v436, %v456
      %v459 = vsub.f32 %v439, %v457
      %v460 = vmul.f32 %v458, %v458
      %v461 = vmul.f32 %v459, %v459
      %v462 = vsel %vm391, %v460, 0.0
      %463 = vadd.xlane.f32.xlu0 %v462
      %v464 = vpop.xlane.xlu0 %463
      %v465 = vsel %vm391, %v461, 0.0
      %466 = vadd.xlane.f32.xlu0 %v465
      %v467 = vpop.xlane.xlu0 %466
      %v468 = vmul.f32 %v464, %v455
      %v469 = vmul.f32 %v467, %v455
      %v470 = vadd.f32 %v468, 1e-05
      %v471 = vadd.f32 %v469, 1e-05
      %v472 = vrsqrt.pop %v470
      %v473 = vmul.f32 %v472, %v470
      %v474 = vmul.f32 %v473, %v472
      %v475 = vmul.f32 0.5, %v474
      %v476 = vsub.f32 1.5, %v475
      %v477 = vmul.f32 %v472, %v476
      %vm478 = vweird.f32 %v470
      %vm479 = vweird.f32 %v472
      %vm480 = vmor %vm478, %vm479
      %v481 = vsel %vm480, %v472, %v477
      %v482 = vrsqrt.pop %v471
      %v483 = vmul.f32 %v482, %v471
      %v484 = vmul.f32 %v483, %v482
      %v485 = vmul.f32 0.5, %v484
      %v486 = vsub.f32 1.5, %v485
      %v487 = vmul.f32 %v482, %v486
      %vm488 = vweird.f32 %v471
      %vm489 = vweird.f32 %v482
      %vm490 = vmor %vm488, %vm489
      %v491 = vsel %vm490, %v482, %v487
      %v492 = vmul.f32 %v458, %v481
      %v493 = vmul.f32 %v459, %v491
      %v495 = vperm.slane %v441, 0
      %v497 = vmul.f32 %v492, %v495
      %v498 = vmul.f32 %v493, %v495
      %v500 = vperm.slane %v442, 0
      %v502 = vadd.f32 %v497, %v500
      %v503 = vadd.f32 %v498, %v500
      %vm504 = vcmp.ge.f32.partialorder %v502, 0.0
      %vm505 = vcmp.ge.f32.partialorder %v503, 0.0
      %v506 = vmul.f32 %v502, 0.01
      %v507 = vmul.f32 %v503, 0.01
      %v508 = vsel %vm504, %v502, %v506
      %v509 = vsel %vm505, %v503, %v507
      %510 = vst.msk [vmem:[#allocation2 + $0x2] sm:$0xff] %vm391, %v508
      %511 = vst.msk [vmem:[#allocation2 + $0xa] sm:$0xff] %vm391, %v509
      %vm512 = vcmask 59394
      %513 = vst.msk [vmem:[#allocation2 - $0x2] sm:$0x4] %vm512, %v508
      %vm514 = vcmask 58369
      %515 = vst.msk [vmem:[#allocation2] sm:$0x2] %vm514, %v508
      %vm516 = vcmask 63494
      %517 = vst.msk [vmem:[#allocation2 + $0xc] sm:$0x40] %vm516, %v509
      %vm518 = vcmask 62469
      %519 = vst.msk [vmem:[#allocation2 + $0xe] sm:$0x20] %vm518, %v509
      %v520 = vld [vmem:[#allocation2] sm:$0xff]
      %v521 = vld [vmem:[#allocation2 + $0x8] sm:$0xff]
      %v522 = vld [vmem:[#allocation2 + $0x1] sm:$0xff]
      %v523 = vld [vmem:[#allocation2 + $0x9] sm:$0xff]
      %v524 = vld [vmem:[#allocation2 + $0x2] sm:$0xff]
      %v525 = vld [vmem:[#allocation2 + $0xa] sm:$0xff]
      %v526 = vld [vmem:[#allocation2 + $0x3] sm:$0xff]
      %v527 = vld [vmem:[#allocation2 + $0xb] sm:$0xff]
      %v528 = vld [vmem:[#allocation2 + $0x4] sm:$0xff]
      %v529 = vld [vmem:[#allocation2 + $0xc] sm:$0xff]
      %532 = vrot.lane.b32.xlu0 %v522, 8
      %v533 = vpop.permute.xlu0 %532
      %534 = vrot.lane.b32.xlu0 %v523, 8
      %v535 = vpop.permute.xlu0 %534
      %540 = vrot.lane.b32.xlu0 %v524, 16
      %v541 = vpop.permute.xlu0 %540
      %542 = vrot.lane.b32.xlu0 %v525, 16
      %v543 = vpop.permute.xlu0 %542
      %548 = vrot.lane.b32.xlu0 %v526, 24
      %v549 = vpop.permute.xlu0 %548
      %550 = vrot.lane.b32.xlu0 %v527, 24
      %v551 = vpop.permute.xlu0 %550
      %556 = vrot.lane.b32.xlu0 %v528, 32
      %v557 = vpop.permute.xlu0 %556
      %558 = vrot.lane.b32.xlu0 %v529, 32
      %v559 = vpop.permute.xlu0 %558
      %v562 = vsel %vm391, %v520, %v533
      %v563 = vsel %vm391, %v521, %v535
      %v564 = vsel %vm397, %v562, %v541
      %v565 = vsel %vm397, %v563, %v543
      %vm566 = vcmask 195584
      %v567 = vsel %vm566, %v564, %v549
      %v568 = vsel %vm566, %v565, %v551
      %vm569 = vcmask 261120
      %v570 = vsel %vm569, %v567, %v557
      %v571 = vsel %vm569, %v568, %v559
      %v572 = vld [vmem:[%s5] sm:$0xff]
      %v573 = vld [vmem:[%s5 + $0x8] sm:$0xff]
      %v574 = vld [vmem:[%s5 + $0x10] sm:$0xff]
      %v575 = vld [vmem:[%s5 + $0x18] sm:$0xff]
      %v576 = vld [vmem:[%s5 + $0x20] sm:$0xff]
      %v577 = vld [vmem:[%s6] sm:$0x1]
      %v579 = vperm.slane %v577, 0
      %vm581 = vcmask 326656
      %v583 = vsel %vm581, %v570, 0
      %v586 = vsel %vm581, %v571, 0
      %588 = vmatpush.msra.mxu0 0.0
      %589 = vmatpush.msra.mxu0 0.0
      %590 = vmatpush.msra.mxu0 0.0
      %591 = vmatpush.msra.mxu0 0.0
      %592 = vmatpush.msra.mxu0 0.0
      %593 = vmatpush.msra.mxu0 0.0
      %594 = vmatpush.msra.mxu0 0.0
      %595 = vmatpush.msra.mxu0 0.0
      %596 = vmatpush.msra.mxu0 0.0
      %597 = vmatpush.msra.mxu0 0.0
      %598 = vmatpush.msra.mxu0 0.0
      %599 = vmatpush.msra.mxu0 %v576
      %600 = vmatpush.msra.mxu0 %v575
      %601 = vmatpush.msra.mxu0 %v574
      %602 = vmatpush.msra.mxu0 %v573
      %603 = vmatpush.msra.mxu0 %v572
      %604 = vmatmul.f32.gmra.mxu0 %v583
      %v605 = vpop.f32.mrf.mxu0
      %v606 = vadd.f32 %v579, %v605
      %607 = vmatmul.f32.gmra.mxu0 %v586
      %v608 = vpop.f32.mrf.mxu0
      %v609 = vadd.f32 %v579, %v608
      %610 = vdwg.mxu0
      %v611 = vld [vmem:[%s7] sm:$0x1]
      %v612 = vld [vmem:[%s8] sm:$0x1]
      %v613 = vsel %vm391, %v606, 0.0
      %614 = vadd.xlane.f32.xlu0 %v613
      %v615 = vpop.xlane.xlu0 %614
      %v616 = vsel %vm391, %v609, 0.0
      %617 = vadd.xlane.f32.xlu0 %v616
      %v618 = vpop.xlane.xlu0 %617
      %v619 = vmul.f32 %v615, %v455
      %v620 = vmul.f32 %v618, %v455
      %v621 = vsub.f32 %v606, %v619
      %v622 = vsub.f32 %v609, %v620
      %v623 = vmul.f32 %v621, %v621
      %v624 = vmul.f32 %v622, %v622
      %v625 = vsel %vm391, %v623, 0.0
      %626 = vadd.xlane.f32.xlu0 %v625
      %v627 = vpop.xlane.xlu0 %626
      %v628 = vsel %vm391, %v624, 0.0
      %629 = vadd.xlane.f32.xlu0 %v628
      %v630 = vpop.xlane.xlu0 %629
      %v631 = vmul.f32 %v627, %v455
      %v632 = vmul.f32 %v630, %v455
      %v633 = vadd.f32 %v631, 1e-05
      %v634 = vadd.f32 %v632, 1e-05
      %v635 = vrsqrt.pop %v633
      %v636 = vmul.f32 %v635, %v633
      %v637 = vmul.f32 %v636, %v635
      %v638 = vmul.f32 0.5, %v637
      %v639 = vsub.f32 1.5, %v638
      %v640 = vmul.f32 %v635, %v639
      %vm641 = vweird.f32 %v633
      %vm642 = vweird.f32 %v635
      %vm643 = vmor %vm641, %vm642
      %v644 = vsel %vm643, %v635, %v640
      %v645 = vrsqrt.pop %v634
      %v646 = vmul.f32 %v645, %v634
      %v647 = vmul.f32 %v646, %v645
      %v648 = vmul.f32 0.5, %v647
      %v649 = vsub.f32 1.5, %v648
      %v650 = vmul.f32 %v645, %v649
      %vm651 = vweird.f32 %v634
      %vm652 = vweird.f32 %v645
      %vm653 = vmor %vm651, %vm652
      %v654 = vsel %vm653, %v645, %v650
      %v655 = vmul.f32 %v621, %v644
      %v656 = vmul.f32 %v622, %v654
      %v658 = vperm.slane %v611, 0
      %v660 = vmul.f32 %v655, %v658
      %v661 = vmul.f32 %v656, %v658
      %v663 = vperm.slane %v612, 0
      %v665 = vadd.f32 %v660, %v663
      %v666 = vadd.f32 %v661, %v663
      %vm667 = vcmp.ge.f32.partialorder %v665, 0.0
      %vm668 = vcmp.ge.f32.partialorder %v666, 0.0
      %v669 = vmul.f32 %v665, 0.01
      %v670 = vmul.f32 %v666, 0.01
      %v671 = vsel %vm667, %v665, %v669
      %v672 = vsel %vm668, %v666, %v670
      %673 = vst.msk [vmem:[%s332] sm:$0xff] %vm391, %v671
      %674 = vst.msk [vmem:[%s332 + $0x8] sm:$0xff] %vm391, %v672
      %p675 = scmp.lt.s32.totalorder %s20, 1
      %s676 = scalar_select %p675, %s20, 1
      %s677 = smul.addr %s676, 2
      %s678 = smul.addr %s677, 8
      %s679 = scalar_lea.vmem %s9, %s678
      // Predicated region
      $region57: #{convblock_forward.1} parent=55 // pred_check
        %p680 = pneg %p232
      $region58: #{convblock_forward.1} parent=55 // pred_check_branch
        %682 = sbr.rel (%p680) target = $region60
      $region59: #{convblock_forward.1} parent=55 // pred_region
        _
      $region60: #{convblock_forward.1} parent=55 // pred_fallthru
        _
    $region56: #{convblock_forward.1} parent=5 // pred_fallthru
      _
    %p683 = scmp.le.s32.totalorder 2, %s15
    // Predicated region
    $region61: #{convblock_forward.1} parent=5 // pred_check
      %p684 = pneg %p683
    $region62: #{convblock_forward.1} parent=5 // pred_check_branch
      %686 = sbr.rel (%p684) target = $region64
    $region63: #{convblock_forward.1} parent=5 // pred_region
      %s687 = ssub.s32 %s15, 2
      // Predicated region
      $region65: #{convblock_forward.1} parent=63 // pred_check
        %p688 = pneg %p238
      $region66: #{convblock_forward.1} parent=63 // pred_check_branch
        %690 = sbr.rel (%p688) target = $region68
      $region67: #{convblock_forward.1} parent=63 // pred_region
        %p691 = scmp.lt.s32.totalorder %s21, 1
        %s692 = scalar_select %p691, %s21, 1
        %s693 = smul.addr %s692, 2
        %s694 = smul.addr %s693, 8
        %s695 = scalar_lea.vmem %s9, %s694
      $region68: #{convblock_forward.1} parent=63 // pred_fallthru
        _
    $region64: #{convblock_forward.1} parent=5 // pred_fallthru
      _
  $region6: #{convblock_forward.1} parent=0 // loop_footer
    %s19 = sadd.s32 1, %s15
  $region7: #{convblock_forward.1} parent=0 // loop_footer_branch
    %14 = sbr.rel target = $region3
  $region8: #{convblock_forward.1} parent=0 // loop_exit
    _

</llo_original>
